<compile_context>
chip_gen: v7x
topology: tpu7x:2x2x1
jax: 0.10.0
libtpu: 0.0.40
codegen_flags: <defaults>
</compile_context>

<pallas_src>
import functools

import jax
import jax.numpy as jnp
from jax.experimental import pallas as pl
from jax.experimental.pallas import tpu as pltpu


def _conv_chain_kernel(w_ref, b_ref, x_ref, o_ref, *, H, W):
    """Three chained 3x3 'same' convs on a block of flattened images.

    w_ref: (27,) f32 SMEM   -- 3 convs x 3x3 taps, row-major
    b_ref: (3,)  f32 SMEM   -- per-conv bias
    x_ref: (Nb, H*W) VMEM   -- Nb images, each flattened row-major (lane-dense)
    o_ref: (Nb, H*W) VMEM
    """
    HW = H * W
    shape = x_ref.shape

    # Hoist all scalar parameter reads out of the unrolled MAC chain.
    ws = [w_ref[k] for k in range(27)]
    bs = [b_ref[c] for c in range(3)]

    # Boundary masks, computed once and shared by all three convs.
    lane = jax.lax.broadcasted_iota(jnp.int32, shape, 1)    # flat pixel index p
    col = lane % W                                          # j = p mod W
    col_ok_m1 = col >= 1              # source column j-1 in range
    col_ok_p1 = col <= (W - 2)        # source column j+1 in range
    row_ok_m1 = lane >= W             # source row i-1 in range
    row_ok_p1 = lane < (H - 1) * W    # source row i+1 in range

    def tap_mask(di, dj):
        conds = []
        if di == -1:
            conds.append(row_ok_m1)
        elif di == 1:
            conds.append(row_ok_p1)
        if dj == -1:
            conds.append(col_ok_m1)
        elif dj == 1:
            conds.append(col_ok_p1)
        if not conds:
            return None
        m = conds[0]
        for extra in conds[1:]:
            m = jnp.logical_and(m, extra)
        return m

    masks = {(di, dj): tap_mask(di, dj)
             for di in (-1, 0, 1) for dj in (-1, 0, 1)}

    x = x_ref[...].astype(jnp.float32)
    for c in range(3):                         # 3 chained convs, all in vregs
        acc = jnp.full(shape, bs[c], jnp.float32)
        for di in (-1, 0, 1):
            for dj in (-1, 0, 1):
                s = di * W + dj                # flat source offset
                if s == 0:
                    shifted = x
                else:
                    # want shifted[p] = x[(p + s) % HW]; np.roll semantics give
                    # result[p] = x[(p - shift) % HW]  =>  shift = -s.
                    shifted = pltpu.roll(x, shift=(-s) % HW, axis=1)
                m = masks[(di, dj)]
                tap = shifted if m is None else jnp.where(m, shifted, 0.0)
                acc = acc + ws[c * 9 + (di + 1) * 3 + (dj + 1)] * tap
        x = acc
    o_ref[...] = x.astype(o_ref.dtype)


def _round_up(x, m):
    return ((x + m - 1) // m) * m


def conv_model_forward(x_nchw, weights, biases, *, images_per_block=None):
    """x_nchw: (N, 1, H, W) float32; weights: (3, 3, 3); biases: (3,)."""
    N, C, H, W = x_nchw.shape
    assert C == 1, "ConvModel uses single-channel convs"
    HW = H * W

    # Lane-dense repack: one image per sublane row, H*W pixels along lanes.
    x_flat = x_nchw.reshape(N, HW).astype(jnp.float32)

    # Batch several images per grid step; sublane dim kept a multiple of 8.
    # Block VMEM cost (f32): nb * HW * 4 bytes (x2 for double buffering) --
    # tiny, comfortably within v7x's 64 MiB VMEM as well as v5e/v6e.
    if images_per_block is None:
        images_per_block = min(_round_up(N, 8), 32)
    nb = images_per_block
    n_pad = _round_up(N, nb)
    if n_pad != N:
        x_flat = jnp.pad(x_flat, ((0, n_pad - N), (0, 0)))

    w_flat = jnp.asarray(weights, jnp.float32).reshape(27)   # SMEM scalars
    b_vec = jnp.asarray(biases, jnp.float32).reshape(3)

    out = pl.pallas_call(
        functools.partial(_conv_chain_kernel, H=H, W=W),
        out_shape=jax.ShapeDtypeStruct((n_pad, HW), jnp.float32),
        grid=(n_pad // nb,),
        in_specs=[
            pl.BlockSpec(memory_space=pltpu.MemorySpace.SMEM),    # weights
            pl.BlockSpec(memory_space=pltpu.MemorySpace.SMEM),    # biases
            pl.BlockSpec((nb, HW), lambda n: (n, 0)),             # image block
        ],
        out_specs=pl.BlockSpec((nb, HW), lambda n: (n, 0)),
        compiler_params=pltpu.CompilerParams(
            dimension_semantics=("parallel",)),   # batch blocks independent
    )(w_flat, b_vec, x_flat)

    return out[:N].reshape(N, 1, H, W)


def _reference_forward(x_nchw, weights, biases):
    """Pure-JAX reference (lax conv) for verification."""
    x = x_nchw
    for c in range(3):
        w = jnp.asarray(weights[c], jnp.float32).reshape(1, 1, 3, 3)
        x = jax.lax.conv_general_dilated(
            x, w, window_strides=(1, 1), padding="SAME",
            dimension_numbers=("NCHW", "OIHW", "NCHW"))
        x = x + biases[c]
    return x


if __name__ == "__main__":
    key = jax.random.PRNGKey(0)
    k_in, k_w3, k_b3 = jax.random.split(key, 3)

    N, C, H, W = 2, 1, 16, 16
    x = jax.random.normal(k_in, (N, C, H, W), jnp.float32)

    # Deterministic parameters, mirroring ConvModel(pos1=1, mat1, pos2=2, mat2):
    #   conv1 <- mat1 (fixed, zero bias), conv2 <- mat2 (fixed, zero bias),
    #   conv3 <- default Conv2d init U(-1/sqrt(9), 1/sqrt(9)).
    mat1 = jnp.array([[0.0, -1.0, 0.0],
                      [-1.0, 4.0, -1.0],
                      [0.0, -1.0, 0.0]], jnp.float32)        # Laplacian
    mat2 = jnp.array([[1.0, 2.0, 1.0],
                      [2.0, 4.0, 2.0],
                      [1.0, 2.0, 1.0]], jnp.float32) / 16.0  # Gaussian blur
    bound = 1.0 / 3.0                                        # 1/sqrt(1*3*3)
    w3 = jax.random.uniform(k_w3, (3, 3), jnp.float32, -bound, bound)
    b3 = jax.random.uniform(k_b3, (), jnp.float32, -bound, bound)

    weights = jnp.stack([mat1, mat2, w3])                    # (3, 3, 3)
    biases = jnp.array([0.0, 0.0, b3], jnp.float32)          # (3,)

    y = conv_model_forward(x, weights, biases)
    y = jax.block_until_ready(y)

    y_ref = _reference_forward(x, weights, biases)
    assert y.shape == (N, C, H, W)
    assert jnp.allclose(y, y_ref, atol=1e-4, rtol=1e-4), "mismatch vs reference"

    print("KERNEL_OK")
</pallas_src>

<mosaic_0001>
module attributes {stable_mosaic.version = 11 : i64} {
  func.func @_conv_chain_kernel(%arg0: i32, %arg1: memref<27xf32, #tpu.memory_space<smem>>, %arg2: memref<3xf32, #tpu.memory_space<smem>>, %arg3: memref<8x256xf32, #tpu.memory_space<vmem>>, %arg4: memref<8x256xf32, #tpu.memory_space<vmem>>) attributes {dimension_semantics = [#tpu.dimension_semantics<parallel>], iteration_bounds = array<i64: 1>, scalar_prefetch = 0 : i64, scratch_operands = 0 : i64, tpu.core_type = #tpu.core_type<tc>, window_params = [{transform_indices = @transform_0, window_bounds = array<i64: 27>}, {transform_indices = @transform_1, window_bounds = array<i64: 3>}, {transform_indices = @transform_2, window_bounds = array<i64: 8, 256>}, {transform_indices = @transform_3, window_bounds = array<i64: 8, 256>}]} {
    %c0 = arith.constant 0 : index
    %0 = memref.load %arg1[%c0] : memref<27xf32, #tpu.memory_space<smem>>
    %c1 = arith.constant 1 : index
    %1 = memref.load %arg1[%c1] : memref<27xf32, #tpu.memory_space<smem>>
    %c2 = arith.constant 2 : index
    %2 = memref.load %arg1[%c2] : memref<27xf32, #tpu.memory_space<smem>>
    %c3 = arith.constant 3 : index
    %3 = memref.load %arg1[%c3] : memref<27xf32, #tpu.memory_space<smem>>
    %c4 = arith.constant 4 : index
    %4 = memref.load %arg1[%c4] : memref<27xf32, #tpu.memory_space<smem>>
    %c5 = arith.constant 5 : index
    %5 = memref.load %arg1[%c5] : memref<27xf32, #tpu.memory_space<smem>>
    %c6 = arith.constant 6 : index
    %6 = memref.load %arg1[%c6] : memref<27xf32, #tpu.memory_space<smem>>
    %c7 = arith.constant 7 : index
    %7 = memref.load %arg1[%c7] : memref<27xf32, #tpu.memory_space<smem>>
    %c8 = arith.constant 8 : index
    %8 = memref.load %arg1[%c8] : memref<27xf32, #tpu.memory_space<smem>>
    %c9 = arith.constant 9 : index
    %9 = memref.load %arg1[%c9] : memref<27xf32, #tpu.memory_space<smem>>
    %c10 = arith.constant 10 : index
    %10 = memref.load %arg1[%c10] : memref<27xf32, #tpu.memory_space<smem>>
    %c11 = arith.constant 11 : index
    %11 = memref.load %arg1[%c11] : memref<27xf32, #tpu.memory_space<smem>>
    %c12 = arith.constant 12 : index
    %12 = memref.load %arg1[%c12] : memref<27xf32, #tpu.memory_space<smem>>
    %c13 = arith.constant 13 : index
    %13 = memref.load %arg1[%c13] : memref<27xf32, #tpu.memory_space<smem>>
    %c14 = arith.constant 14 : index
    %14 = memref.load %arg1[%c14] : memref<27xf32, #tpu.memory_space<smem>>
    %c15 = arith.constant 15 : index
    %15 = memref.load %arg1[%c15] : memref<27xf32, #tpu.memory_space<smem>>
    %c16 = arith.constant 16 : index
    %16 = memref.load %arg1[%c16] : memref<27xf32, #tpu.memory_space<smem>>
    %c17 = arith.constant 17 : index
    %17 = memref.load %arg1[%c17] : memref<27xf32, #tpu.memory_space<smem>>
    %c18 = arith.constant 18 : index
    %18 = memref.load %arg1[%c18] : memref<27xf32, #tpu.memory_space<smem>>
    %c19 = arith.constant 19 : index
    %19 = memref.load %arg1[%c19] : memref<27xf32, #tpu.memory_space<smem>>
    %c20 = arith.constant 20 : index
    %20 = memref.load %arg1[%c20] : memref<27xf32, #tpu.memory_space<smem>>
    %c21 = arith.constant 21 : index
    %21 = memref.load %arg1[%c21] : memref<27xf32, #tpu.memory_space<smem>>
    %c22 = arith.constant 22 : index
    %22 = memref.load %arg1[%c22] : memref<27xf32, #tpu.memory_space<smem>>
    %c23 = arith.constant 23 : index
    %23 = memref.load %arg1[%c23] : memref<27xf32, #tpu.memory_space<smem>>
    %c24 = arith.constant 24 : index
    %24 = memref.load %arg1[%c24] : memref<27xf32, #tpu.memory_space<smem>>
    %c25 = arith.constant 25 : index
    %25 = memref.load %arg1[%c25] : memref<27xf32, #tpu.memory_space<smem>>
    %c26 = arith.constant 26 : index
    %26 = memref.load %arg1[%c26] : memref<27xf32, #tpu.memory_space<smem>>
    %c0_0 = arith.constant 0 : index
    %27 = memref.load %arg2[%c0_0] : memref<3xf32, #tpu.memory_space<smem>>
    %c1_1 = arith.constant 1 : index
    %28 = memref.load %arg2[%c1_1] : memref<3xf32, #tpu.memory_space<smem>>
    %c2_2 = arith.constant 2 : index
    %29 = memref.load %arg2[%c2_2] : memref<3xf32, #tpu.memory_space<smem>>
    %30 = tpu.iota {dimensions = array<i32: 1>} : vector<8x256xi32>
    %c16_i32 = arith.constant 16 : i32
    %c0_i32 = arith.constant 0 : i32
    %31 = arith.cmpi eq, %c16_i32, %c0_i32 : i32
    %c1_i32 = arith.constant 1 : i32
    %32 = arith.select %31, %c1_i32, %c16_i32 : i32
    %33 = vector.broadcast %32 : i32 to vector<8x256xi32>
    %34 = arith.remsi %30, %33 : vector<8x256xi32>
    %c0_i32_3 = arith.constant 0 : i32
    %35 = vector.broadcast %c0_i32_3 : i32 to vector<8x256xi32>
    %36 = arith.cmpi ne, %34, %35 : vector<8x256xi32>
    %c0_i32_4 = arith.constant 0 : i32
    %37 = vector.broadcast %c0_i32_4 : i32 to vector<8x256xi32>
    %38 = arith.cmpi slt, %34, %37 : vector<8x256xi32>
    %c0_i32_5 = arith.constant 0 : i32
    %39 = arith.cmpi slt, %32, %c0_i32_5 : i32
    %40 = vector.broadcast %39 : i1 to vector<8x256xi1>
    %41 = vector.broadcast %40 : vector<8x256xi1> to vector<8x256xi1>
    %42 = arith.xori %38, %41 : vector<8x256xi1>
    %43 = arith.andi %42, %36 : vector<8x256xi1>
    %44 = vector.broadcast %32 : i32 to vector<8x256xi32>
    %45 = arith.addi %34, %44 : vector<8x256xi32>
    %46 = arith.select %43, %45, %34 : vector<8x256xi1>, vector<8x256xi32>
    %c1_i32_6 = arith.constant 1 : i32
    %47 = vector.broadcast %c1_i32_6 : i32 to vector<8x256xi32>
    %48 = arith.cmpi sge, %46, %47 : vector<8x256xi32>
    %c14_i32 = arith.constant 14 : i32
    %49 = vector.broadcast %c14_i32 : i32 to vector<8x256xi32>
    %50 = arith.cmpi sle, %46, %49 : vector<8x256xi32>
    %c16_i32_7 = arith.constant 16 : i32
    %51 = vector.broadcast %c16_i32_7 : i32 to vector<8x256xi32>
    %52 = arith.cmpi sge, %30, %51 : vector<8x256xi32>
    %c240_i32 = arith.constant 240 : i32
    %53 = vector.broadcast %c240_i32 : i32 to vector<8x256xi32>
    %54 = arith.cmpi slt, %30, %53 : vector<8x256xi32>
    %55 = arith.andi %52, %48 : vector<8x256xi1>
    %56 = arith.andi %52, %50 : vector<8x256xi1>
    %57 = arith.andi %54, %48 : vector<8x256xi1>
    %58 = arith.andi %54, %50 : vector<8x256xi1>
    %c0_8 = arith.constant 0 : index
    %c0_9 = arith.constant 0 : index
    %59 = vector.load %arg3[%c0_8, %c0_9] : memref<8x256xf32, #tpu.memory_space<vmem>>, vector<8x256xf32>
    %60 = vector.broadcast %27 : f32 to vector<8x256xf32>
    %c17_i32 = arith.constant 17 : i32
    %61 = tpu.dynamic_rotate %59 by %c17_i32 dim 1 : vector<8x256xf32>, i32 -> vector<8x256xf32>
    %cst = arith.constant 0.000000e+00 : f32
    %62 = vector.broadcast %cst : f32 to vector<8x256xf32>
    %63 = arith.select %55, %61, %62 : vector<8x256xi1>, vector<8x256xf32>
    %64 = vector.broadcast %0 : f32 to vector<8x256xf32>
    %65 = arith.mulf %64, %63 : vector<8x256xf32>
    %66 = arith.addf %60, %65 : vector<8x256xf32>
    %c16_i32_10 = arith.constant 16 : i32
    %67 = tpu.dynamic_rotate %59 by %c16_i32_10 dim 1 : vector<8x256xf32>, i32 -> vector<8x256xf32>
    %cst_11 = arith.constant 0.000000e+00 : f32
    %68 = vector.broadcast %cst_11 : f32 to vector<8x256xf32>
    %69 = arith.select %52, %67, %68 : vector<8x256xi1>, vector<8x256xf32>
    %70 = vector.broadcast %1 : f32 to vector<8x256xf32>
    %71 = arith.mulf %70, %69 : vector<8x256xf32>
    %72 = arith.addf %66, %71 : vector<8x256xf32>
    %c15_i32 = arith.constant 15 : i32
    %73 = tpu.dynamic_rotate %59 by %c15_i32 dim 1 : vector<8x256xf32>, i32 -> vector<8x256xf32>
    %cst_12 = arith.constant 0.000000e+00 : f32
    %74 = vector.broadcast %cst_12 : f32 to vector<8x256xf32>
    %75 = arith.select %56, %73, %74 : vector<8x256xi1>, vector<8x256xf32>
    %76 = vector.broadcast %2 : f32 to vector<8x256xf32>
    %77 = arith.mulf %76, %75 : vector<8x256xf32>
    %78 = arith.addf %72, %77 : vector<8x256xf32>
    %c1_i32_13 = arith.constant 1 : i32
    %79 = tpu.dynamic_rotate %59 by %c1_i32_13 dim 1 : vector<8x256xf32>, i32 -> vector<8x256xf32>
    %cst_14 = arith.constant 0.000000e+00 : f32
    %80 = vector.broadcast %cst_14 : f32 to vector<8x256xf32>
    %81 = arith.select %48, %79, %80 : vector<8x256xi1>, vector<8x256xf32>
    %82 = vector.broadcast %3 : f32 to vector<8x256xf32>
    %83 = arith.mulf %82, %81 : vector<8x256xf32>
    %84 = arith.addf %78, %83 : vector<8x256xf32>
    %85 = vector.broadcast %4 : f32 to vector<8x256xf32>
    %86 = arith.mulf %85, %59 : vector<8x256xf32>
    %87 = arith.addf %84, %86 : vector<8x256xf32>
    %c255_i32 = arith.constant 255 : i32
    %88 = tpu.dynamic_rotate %59 by %c255_i32 dim 1 : vector<8x256xf32>, i32 -> vector<8x256xf32>
    %cst_15 = arith.constant 0.000000e+00 : f32
    %89 = vector.broadcast %cst_15 : f32 to vector<8x256xf32>
    %90 = arith.select %50, %88, %89 : vector<8x256xi1>, vector<8x256xf32>
    %91 = vector.broadcast %5 : f32 to vector<8x256xf32>
    %92 = arith.mulf %91, %90 : vector<8x256xf32>
    %93 = arith.addf %87, %92 : vector<8x256xf32>
    %c241_i32 = arith.constant 241 : i32
    %94 = tpu.dynamic_rotate %59 by %c241_i32 dim 1 : vector<8x256xf32>, i32 -> vector<8x256xf32>
    %cst_16 = arith.constant 0.000000e+00 : f32
    %95 = vector.broadcast %cst_16 : f32 to vector<8x256xf32>
    %96 = arith.select %57, %94, %95 : vector<8x256xi1>, vector<8x256xf32>
    %97 = vector.broadcast %6 : f32 to vector<8x256xf32>
    %98 = arith.mulf %97, %96 : vector<8x256xf32>
    %99 = arith.addf %93, %98 : vector<8x256xf32>
    %c240_i32_17 = arith.constant 240 : i32
    %100 = tpu.dynamic_rotate %59 by %c240_i32_17 dim 1 : vector<8x256xf32>, i32 -> vector<8x256xf32>
    %cst_18 = arith.constant 0.000000e+00 : f32
    %101 = vector.broadcast %cst_18 : f32 to vector<8x256xf32>
    %102 = arith.select %54, %100, %101 : vector<8x256xi1>, vector<8x256xf32>
    %103 = vector.broadcast %7 : f32 to vector<8x256xf32>
    %104 = arith.mulf %103, %102 : vector<8x256xf32>
    %105 = arith.addf %99, %104 : vector<8x256xf32>
    %c239_i32 = arith.constant 239 : i32
    %106 = tpu.dynamic_rotate %59 by %c239_i32 dim 1 : vector<8x256xf32>, i32 -> vector<8x256xf32>
    %cst_19 = arith.constant 0.000000e+00 : f32
    %107 = vector.broadcast %cst_19 : f32 to vector<8x256xf32>
    %108 = arith.select %58, %106, %107 : vector<8x256xi1>, vector<8x256xf32>
    %109 = vector.broadcast %8 : f32 to vector<8x256xf32>
    %110 = arith.mulf %109, %108 : vector<8x256xf32>
    %111 = arith.addf %105, %110 : vector<8x256xf32>
    %112 = vector.broadcast %28 : f32 to vector<8x256xf32>
    %c17_i32_20 = arith.constant 17 : i32
    %113 = tpu.dynamic_rotate %111 by %c17_i32_20 dim 1 : vector<8x256xf32>, i32 -> vector<8x256xf32>
    %cst_21 = arith.constant 0.000000e+00 : f32
    %114 = vector.broadcast %cst_21 : f32 to vector<8x256xf32>
    %115 = arith.select %55, %113, %114 : vector<8x256xi1>, vector<8x256xf32>
    %116 = vector.broadcast %9 : f32 to vector<8x256xf32>
    %117 = arith.mulf %116, %115 : vector<8x256xf32>
    %118 = arith.addf %112, %117 : vector<8x256xf32>
    %c16_i32_22 = arith.constant 16 : i32
    %119 = tpu.dynamic_rotate %111 by %c16_i32_22 dim 1 : vector<8x256xf32>, i32 -> vector<8x256xf32>
    %cst_23 = arith.constant 0.000000e+00 : f32
    %120 = vector.broadcast %cst_23 : f32 to vector<8x256xf32>
    %121 = arith.select %52, %119, %120 : vector<8x256xi1>, vector<8x256xf32>
    %122 = vector.broadcast %10 : f32 to vector<8x256xf32>
    %123 = arith.mulf %122, %121 : vector<8x256xf32>
    %124 = arith.addf %118, %123 : vector<8x256xf32>
    %c15_i32_24 = arith.constant 15 : i32
    %125 = tpu.dynamic_rotate %111 by %c15_i32_24 dim 1 : vector<8x256xf32>, i32 -> vector<8x256xf32>
    %cst_25 = arith.constant 0.000000e+00 : f32
    %126 = vector.broadcast %cst_25 : f32 to vector<8x256xf32>
    %127 = arith.select %56, %125, %126 : vector<8x256xi1>, vector<8x256xf32>
    %128 = vector.broadcast %11 : f32 to vector<8x256xf32>
    %129 = arith.mulf %128, %127 : vector<8x256xf32>
    %130 = arith.addf %124, %129 : vector<8x256xf32>
    %c1_i32_26 = arith.constant 1 : i32
    %131 = tpu.dynamic_rotate %111 by %c1_i32_26 dim 1 : vector<8x256xf32>, i32 -> vector<8x256xf32>
    %cst_27 = arith.constant 0.000000e+00 : f32
    %132 = vector.broadcast %cst_27 : f32 to vector<8x256xf32>
    %133 = arith.select %48, %131, %132 : vector<8x256xi1>, vector<8x256xf32>
    %134 = vector.broadcast %12 : f32 to vector<8x256xf32>
    %135 = arith.mulf %134, %133 : vector<8x256xf32>
    %136 = arith.addf %130, %135 : vector<8x256xf32>
    %137 = vector.broadcast %13 : f32 to vector<8x256xf32>
    %138 = arith.mulf %137, %111 : vector<8x256xf32>
    %139 = arith.addf %136, %138 : vector<8x256xf32>
    %c255_i32_28 = arith.constant 255 : i32
    %140 = tpu.dynamic_rotate %111 by %c255_i32_28 dim 1 : vector<8x256xf32>, i32 -> vector<8x256xf32>
    %cst_29 = arith.constant 0.000000e+00 : f32
    %141 = vector.broadcast %cst_29 : f32 to vector<8x256xf32>
    %142 = arith.select %50, %140, %141 : vector<8x256xi1>, vector<8x256xf32>
    %143 = vector.broadcast %14 : f32 to vector<8x256xf32>
    %144 = arith.mulf %143, %142 : vector<8x256xf32>
    %145 = arith.addf %139, %144 : vector<8x256xf32>
    %c241_i32_30 = arith.constant 241 : i32
    %146 = tpu.dynamic_rotate %111 by %c241_i32_30 dim 1 : vector<8x256xf32>, i32 -> vector<8x256xf32>
    %cst_31 = arith.constant 0.000000e+00 : f32
    %147 = vector.broadcast %cst_31 : f32 to vector<8x256xf32>
    %148 = arith.select %57, %146, %147 : vector<8x256xi1>, vector<8x256xf32>
    %149 = vector.broadcast %15 : f32 to vector<8x256xf32>
    %150 = arith.mulf %149, %148 : vector<8x256xf32>
    %151 = arith.addf %145, %150 : vector<8x256xf32>
    %c240_i32_32 = arith.constant 240 : i32
    %152 = tpu.dynamic_rotate %111 by %c240_i32_32 dim 1 : vector<8x256xf32>, i32 -> vector<8x256xf32>
    %cst_33 = arith.constant 0.000000e+00 : f32
    %153 = vector.broadcast %cst_33 : f32 to vector<8x256xf32>
    %154 = arith.select %54, %152, %153 : vector<8x256xi1>, vector<8x256xf32>
    %155 = vector.broadcast %16 : f32 to vector<8x256xf32>
    %156 = arith.mulf %155, %154 : vector<8x256xf32>
    %157 = arith.addf %151, %156 : vector<8x256xf32>
    %c239_i32_34 = arith.constant 239 : i32
    %158 = tpu.dynamic_rotate %111 by %c239_i32_34 dim 1 : vector<8x256xf32>, i32 -> vector<8x256xf32>
    %cst_35 = arith.constant 0.000000e+00 : f32
    %159 = vector.broadcast %cst_35 : f32 to vector<8x256xf32>
    %160 = arith.select %58, %158, %159 : vector<8x256xi1>, vector<8x256xf32>
    %161 = vector.broadcast %17 : f32 to vector<8x256xf32>
    %162 = arith.mulf %161, %160 : vector<8x256xf32>
    %163 = arith.addf %157, %162 : vector<8x256xf32>
    %164 = vector.broadcast %29 : f32 to vector<8x256xf32>
    %c17_i32_36 = arith.constant 17 : i32
    %165 = tpu.dynamic_rotate %163 by %c17_i32_36 dim 1 : vector<8x256xf32>, i32 -> vector<8x256xf32>
    %cst_37 = arith.constant 0.000000e+00 : f32
    %166 = vector.broadcast %cst_37 : f32 to vector<8x256xf32>
    %167 = arith.select %55, %165, %166 : vector<8x256xi1>, vector<8x256xf32>
    %168 = vector.broadcast %18 : f32 to vector<8x256xf32>
    %169 = arith.mulf %168, %167 : vector<8x256xf32>
    %170 = arith.addf %164, %169 : vector<8x256xf32>
    %c16_i32_38 = arith.constant 16 : i32
    %171 = tpu.dynamic_rotate %163 by %c16_i32_38 dim 1 : vector<8x256xf32>, i32 -> vector<8x256xf32>
    %cst_39 = arith.constant 0.000000e+00 : f32
    %172 = vector.broadcast %cst_39 : f32 to vector<8x256xf32>
    %173 = arith.select %52, %171, %172 : vector<8x256xi1>, vector<8x256xf32>
    %174 = vector.broadcast %19 : f32 to vector<8x256xf32>
    %175 = arith.mulf %174, %173 : vector<8x256xf32>
    %176 = arith.addf %170, %175 : vector<8x256xf32>
    %c15_i32_40 = arith.constant 15 : i32
    %177 = tpu.dynamic_rotate %163 by %c15_i32_40 dim 1 : vector<8x256xf32>, i32 -> vector<8x256xf32>
    %cst_41 = arith.constant 0.000000e+00 : f32
    %178 = vector.broadcast %cst_41 : f32 to vector<8x256xf32>
    %179 = arith.select %56, %177, %178 : vector<8x256xi1>, vector<8x256xf32>
    %180 = vector.broadcast %20 : f32 to vector<8x256xf32>
    %181 = arith.mulf %180, %179 : vector<8x256xf32>
    %182 = arith.addf %176, %181 : vector<8x256xf32>
    %c1_i32_42 = arith.constant 1 : i32
    %183 = tpu.dynamic_rotate %163 by %c1_i32_42 dim 1 : vector<8x256xf32>, i32 -> vector<8x256xf32>
    %cst_43 = arith.constant 0.000000e+00 : f32
    %184 = vector.broadcast %cst_43 : f32 to vector<8x256xf32>
    %185 = arith.select %48, %183, %184 : vector<8x256xi1>, vector<8x256xf32>
    %186 = vector.broadcast %21 : f32 to vector<8x256xf32>
    %187 = arith.mulf %186, %185 : vector<8x256xf32>
    %188 = arith.addf %182, %187 : vector<8x256xf32>
    %189 = vector.broadcast %22 : f32 to vector<8x256xf32>
    %190 = arith.mulf %189, %163 : vector<8x256xf32>
    %191 = arith.addf %188, %190 : vector<8x256xf32>
    %c255_i32_44 = arith.constant 255 : i32
    %192 = tpu.dynamic_rotate %163 by %c255_i32_44 dim 1 : vector<8x256xf32>, i32 -> vector<8x256xf32>
    %cst_45 = arith.constant 0.000000e+00 : f32
    %193 = vector.broadcast %cst_45 : f32 to vector<8x256xf32>
    %194 = arith.select %50, %192, %193 : vector<8x256xi1>, vector<8x256xf32>
    %195 = vector.broadcast %23 : f32 to vector<8x256xf32>
    %196 = arith.mulf %195, %194 : vector<8x256xf32>
    %197 = arith.addf %191, %196 : vector<8x256xf32>
    %c241_i32_46 = arith.constant 241 : i32
    %198 = tpu.dynamic_rotate %163 by %c241_i32_46 dim 1 : vector<8x256xf32>, i32 -> vector<8x256xf32>
    %cst_47 = arith.constant 0.000000e+00 : f32
    %199 = vector.broadcast %cst_47 : f32 to vector<8x256xf32>
    %200 = arith.select %57, %198, %199 : vector<8x256xi1>, vector<8x256xf32>
    %201 = vector.broadcast %24 : f32 to vector<8x256xf32>
    %202 = arith.mulf %201, %200 : vector<8x256xf32>
    %203 = arith.addf %197, %202 : vector<8x256xf32>
    %c240_i32_48 = arith.constant 240 : i32
    %204 = tpu.dynamic_rotate %163 by %c240_i32_48 dim 1 : vector<8x256xf32>, i32 -> vector<8x256xf32>
    %cst_49 = arith.constant 0.000000e+00 : f32
    %205 = vector.broadcast %cst_49 : f32 to vector<8x256xf32>
    %206 = arith.select %54, %204, %205 : vector<8x256xi1>, vector<8x256xf32>
    %207 = vector.broadcast %25 : f32 to vector<8x256xf32>
    %208 = arith.mulf %207, %206 : vector<8x256xf32>
    %209 = arith.addf %203, %208 : vector<8x256xf32>
    %c239_i32_50 = arith.constant 239 : i32
    %210 = tpu.dynamic_rotate %163 by %c239_i32_50 dim 1 : vector<8x256xf32>, i32 -> vector<8x256xf32>
    %cst_51 = arith.constant 0.000000e+00 : f32
    %211 = vector.broadcast %cst_51 : f32 to vector<8x256xf32>
    %212 = arith.select %58, %210, %211 : vector<8x256xi1>, vector<8x256xf32>
    %213 = vector.broadcast %26 : f32 to vector<8x256xf32>
    %214 = arith.mulf %213, %212 : vector<8x256xf32>
    %215 = arith.addf %209, %214 : vector<8x256xf32>
    %c0_52 = arith.constant 0 : index
    %c0_53 = arith.constant 0 : index
    %216 = vector.load %arg4[%c0_52, %c0_53] : memref<8x256xf32, #tpu.memory_space<vmem>>, vector<8x256xf32>
    tpu.vector_store %arg4[%c0_52, %c0_53], %215 {strides = array<i32>} : memref<8x256xf32, #tpu.memory_space<vmem>>, vector<8x256xf32>,
    return
  }
  func.func @transform_0(%arg0: i32) -> i32 {
    %c0_i32 = arith.constant 0 : i32
    %c0_i32_0 = arith.constant 0 : i32
    return %c0_i32 : i32
  }
  func.func @transform_1(%arg0: i32) -> i32 {
    %c0_i32 = arith.constant 0 : i32
    %c0_i32_0 = arith.constant 0 : i32
    return %c0_i32 : i32
  }
  func.func @transform_2(%arg0: i32) -> (i32, i32) {
    %c0_i32 = arith.constant 0 : i32
    %c0_i32_0 = arith.constant 0 : i32
    return %arg0, %c0_i32 : i32, i32
  }
  func.func @transform_3(%arg0: i32) -> (i32, i32) {
    %c0_i32 = arith.constant 0 : i32
    %c0_i32_0 = arith.constant 0 : i32
    return %arg0, %c0_i32 : i32, i32
  }
}

</mosaic_0001>

<llo_original>
// kernel: tpu_custom_call.1
$region0: #{tpu_custom_call.1}
  #allocation0 [shape = 'u32[]', space=smem, size = 0x4, offset = 0x4, fixed_abs, tag = 'smem constant byte address 0x4 - core index']
  #allocation1 [shape = 'u32[144,128]{1,0:T(1,128)}', space=vmem, size = 0x12000, scoped, tag = 'internal scratch']
  %s0 = inlined_call_operand.hbm [shape: f32[27], index: 0, kind: input, shape index: {}]
  %s1 = inlined_call_operand.vmem [shape: f32[3], index: 1, kind: input, shape index: {}]
  %s2 = inlined_call_operand.hbm [shape: f32[8,256], index: 2, kind: input, shape index: {}]
  %s3 = inlined_call_operand.hbm [shape: f32[8,256], index: 3, kind: output, shape index: {}]
  %s4 = sld [smem:[#allocation0]]
  $region34: #{tpu_custom_call.1} parent=0
    _
  %s6 = ssub.s32 1, %s4
  %s7 = scalar_select 0, %s6, %s4
  $region1: #{tpu_custom_call.1} parent=0
    #allocation2 [shape = 'u8[512]{0}', space=smem, size = 0x200, scoped, tag = 'input window, operand 0, single buffered']
    #allocation3 [shape = 's32[1]{0}', space=sflag, size = 0x4, scoped, tag = 'scoped memory for tpu_custom_call.1']
    #allocation4 [shape = 's32[1]{0}', space=sflag, size = 0x4, scoped, tag = 'scoped memory for tpu_custom_call.1']
    #allocation5 [shape = 's32[1]{0}', space=sflag, size = 0x4, scoped, tag = 'scoped memory for tpu_custom_call.1']
    #allocation6 [shape = 's32[1]{0}', space=sflag, size = 0x4, scoped, tag = 'scoped memory for tpu_custom_call.1']
    #allocation7 [shape = 'u8[512]{0}', space=smem, size = 0x200, scoped, tag = 'input window, operand 1, single buffered']
    #allocation8 [shape = 'u8[8192]{0}', space=vmem, size = 0x2000, scoped, tag = 'input window, operand 2, single buffered']
    #allocation9 [shape = 'u8[8192]{0}', space=vmem, size = 0x2000, scoped, tag = 'output window, operand 0, single buffered']
    %8 = vsyncpa [#allocation5], 0
    %9 = vsyncpa [#allocation6], 0
    %10 = vsyncpa [#allocation3], 0
    %11 = vsyncpa [#allocation4], 0
    // Predicated region
    $region2: #{tpu_custom_call.1} parent=1 // pred_check
      _
    $region3: #{tpu_custom_call.1} parent=1 // pred_check_branch
      %13 = sbr.rel (0) target = $region5
    $region4: #{tpu_custom_call.1} parent=1 // pred_region
      %s15 = ssub.s32 16, 16
      %16 = vsyncadd [#allocation5], %s15
      %19 = dma.hbm_to_smem %s0, 16, [#allocation2], [#allocation5]
    $region5: #{tpu_custom_call.1} parent=1 // pred_fallthru
      _
    // Predicated region
    $region6: #{tpu_custom_call.1} parent=1 // pred_check
      _
    $region7: #{tpu_custom_call.1} parent=1 // pred_check_branch
      %21 = sbr.rel (0) target = $region9
    $region8: #{tpu_custom_call.1} parent=1 // pred_region
      %s23 = ssub.s32 16, 16
      %24 = vsyncadd [#allocation6], %s23
      %s26 = sshll.u32 %s1, 4
      %s27 = int_to_ptr.vmem [resolvable:$true] %s26
      %29 = dma.vmem_to_smem %s27, 16, [#allocation7], [#allocation6]
    $region9: #{tpu_custom_call.1} parent=1 // pred_fallthru
      _
    // Predicated region
    $region10: #{tpu_custom_call.1} parent=1 // pred_check
      _
    $region11: #{tpu_custom_call.1} parent=1 // pred_check_branch
      %31 = sbr.rel (0) target = $region13
    $region12: #{tpu_custom_call.1} parent=1 // pred_region
      %s33 = ssub.s32 256, 256
      %34 = vsyncadd [#allocation3], %s33
      %s36 = sshll.u32 [#allocation8], 4
      %s37 = int_to_ptr.vmem [resolvable:$true] %s36
      %39 = dma.hbm_to_vmem [thread:$0]  %s2, 256, %s37, [#allocation3]
    $region13: #{tpu_custom_call.1} parent=1 // pred_fallthru
      _
    // Predicated region
    $region14: #{tpu_custom_call.1} parent=1 // pred_check
      _
    $region15: #{tpu_custom_call.1} parent=1 // pred_check_branch
      %41 = sbr.rel (0) target = $region17
    $region16: #{tpu_custom_call.1} parent=1 // pred_region
      %42 = dma.done [#allocation5], 16
    $region17: #{tpu_custom_call.1} parent=1 // pred_fallthru
      _
    // Predicated region
    $region18: #{tpu_custom_call.1} parent=1 // pred_check
      _
    $region19: #{tpu_custom_call.1} parent=1 // pred_check_branch
      %44 = sbr.rel (0) target = $region21
    $region20: #{tpu_custom_call.1} parent=1 // pred_region
      %45 = dma.done [#allocation6], 16
    $region21: #{tpu_custom_call.1} parent=1 // pred_fallthru
      _
    // Predicated region
    $region22: #{tpu_custom_call.1} parent=1 // pred_check
      _
    $region23: #{tpu_custom_call.1} parent=1 // pred_check_branch
      %47 = sbr.rel (0) target = $region25
    $region24: #{tpu_custom_call.1} parent=1 // pred_region
      %48 = dma.done [#allocation3], 256
    $region25: #{tpu_custom_call.1} parent=1 // pred_fallthru
      _
    %49 = sfence
    %s50 = sld [smem:[#allocation2]]
    %s51 = sld [smem:[#allocation2 + $0x1]]
    %s52 = sld [smem:[#allocation2 + $0x2]]
    %s53 = sld [smem:[#allocation2 + $0x3]]
    %s54 = sld [smem:[#allocation2 + $0x4]]
    %s55 = sld [smem:[#allocation2 + $0x5]]
    %s56 = sld [smem:[#allocation2 + $0x6]]
    %s57 = sld [smem:[#allocation2 + $0x7]]
    %s58 = sld [smem:[#allocation2 + $0x8]]
    %s59 = sld [smem:[#allocation2 + $0x9]]
    %s60 = sld [smem:[#allocation2 + $0xa]]
    %s61 = sld [smem:[#allocation2 + $0xb]]
    %s62 = sld [smem:[#allocation2 + $0xc]]
    %s63 = sld [smem:[#allocation2 + $0xd]]
    %s64 = sld [smem:[#allocation2 + $0xe]]
    %s65 = sld [smem:[#allocation2 + $0xf]]
    %s66 = sld [smem:[#allocation2 + $0x10]]
    %s67 = sld [smem:[#allocation2 + $0x11]]
    %s68 = sld [smem:[#allocation2 + $0x12]]
    %s69 = sld [smem:[#allocation2 + $0x13]]
    %s70 = sld [smem:[#allocation2 + $0x14]]
    %s71 = sld [smem:[#allocation2 + $0x15]]
    %s72 = sld [smem:[#allocation2 + $0x16]]
    %s73 = sld [smem:[#allocation2 + $0x17]]
    %s74 = sld [smem:[#allocation2 + $0x18]]
    %s75 = sld [smem:[#allocation2 + $0x19]]
    %s76 = sld [smem:[#allocation2 + $0x1a]]
    %s77 = sld [smem:[#allocation7]]
    %s78 = sld [smem:[#allocation7 + $0x1]]
    %s79 = sld [smem:[#allocation7 + $0x2]]
    %v80 = vlaneseq
    %v81 = vand.u32 %v80, 127
    %v82 = vadd.s32 %v81, 128
    %vm83 = vcmp.lt.s32.totalorder %v81, 0
    %v84 = vsub.s32 0, %v81
    %v85 = vsel %vm83, %v84, %v81
    %v86 = vshrl.u32 %v85, 4
    %v87 = vand.u32 %v85, 15
    %v88 = vsub.s32 0, %v87
    %v89 = vsel %vm83, %v88, %v87
    %vm90 = vcmp.lt.s32.totalorder %v82, 0
    %v91 = vsub.s32 0, %v82
    %v92 = vsel %vm90, %v91, %v82
    %v93 = vshrl.u32 %v92, 4
    %v94 = vand.u32 %v92, 15
    %v95 = vsub.s32 0, %v94
    %v96 = vsel %vm90, %v95, %v94
    %vm97 = vcmp.ne.s32.totalorder %v89, 0
    %vm98 = vcmp.ne.s32.totalorder %v96, 0
    %vm99 = vcmp.lt.s32.totalorder %v89, 0
    %vm100 = vcmp.lt.s32.totalorder %v96, 0
    %vm101 = vmand %vm99, %vm97
    %vm102 = vmand %vm100, %vm98
    %v103 = vadd.s32 %v89, 16
    %v104 = vadd.s32 %v96, 16
    %v105 = vsel %vm101, %v103, %v89
    %v106 = vsel %vm102, %v104, %v96
    %vm107 = vcmp.ge.s32.totalorder %v105, 1
    %vm108 = vcmp.ge.s32.totalorder %v106, 1
    %vm109 = vcmp.le.s32.totalorder %v105, 14
    %vm110 = vcmp.le.s32.totalorder %v106, 14
    %vm111 = vcmp.ge.s32.totalorder %v81, 16
    %vm112 = vcmp.ge.s32.totalorder %v82, 16
    %vm113 = vcmp.lt.s32.totalorder %v81, 240
    %vm114 = vcmp.lt.s32.totalorder %v82, 240
    %vm115 = vmand %vm111, %vm107
    %vm116 = vmand %vm112, %vm108
    %vm117 = vmand %vm111, %vm109
    %vm118 = vmand %vm112, %vm110
    %vm119 = vmand %vm113, %vm107
    %vm120 = vmand %vm114, %vm108
    %vm121 = vmand %vm113, %vm109
    %vm122 = vmand %vm114, %vm110
    %v123 = vld [vmem:[#allocation8] sm:$0xff]
    %v124 = vld [vmem:[#allocation8 + $0x8] sm:$0xff]
    %v125 = vstv %s77
    %126 = vrot.lane.b32.xlu0 %v123, 17
    %v127 = vpop.permute.xlu0 %126
    %128 = vrot.lane.b32.xlu0 %v124, 17
    %v129 = vpop.permute.xlu0 %128
    %vm130 = vcmp.lt.s32.totalorder %v81, 17
    %v131 = vsel %vm130, %v127, %v129
    %v132 = vsel %vm130, %v129, %v127
    %v133 = vsel %vm115, %v132, 0.0
    %v134 = vsel %vm116, %v131, 0.0
    %v135 = vstv %s50
    %v136 = vmul.f32 %v135, %v133
    %v137 = vmul.f32 %v135, %v134
    %v138 = vadd.f32 %v125, %v136
    %v139 = vadd.f32 %v125, %v137
    %140 = vrot.lane.b32.xlu0 %v123, 16
    %v141 = vpop.permute.xlu0 %140
    %142 = vrot.lane.b32.xlu0 %v124, 16
    %v143 = vpop.permute.xlu0 %142
    %vm144 = vcmp.lt.s32.totalorder %v81, 16
    %v145 = vsel %vm144, %v141, %v143
    %v146 = vsel %vm144, %v143, %v141
    %v147 = vsel %vm111, %v146, 0.0
    %v148 = vsel %vm112, %v145, 0.0
    %v149 = vstv %s51
    %v150 = vmul.f32 %v149, %v147
    %v151 = vmul.f32 %v149, %v148
    %v152 = vadd.f32 %v138, %v150
    %v153 = vadd.f32 %v139, %v151
    %154 = vrot.lane.b32.xlu0 %v123, 15
    %v155 = vpop.permute.xlu0 %154
    %156 = vrot.lane.b32.xlu0 %v124, 15
    %v157 = vpop.permute.xlu0 %156
    %vm158 = vcmp.lt.s32.totalorder %v81, 15
    %v159 = vsel %vm158, %v155, %v157
    %v160 = vsel %vm158, %v157, %v155
    %v161 = vsel %vm117, %v160, 0.0
    %v162 = vsel %vm118, %v159, 0.0
    %v163 = vstv %s52
    %v164 = vmul.f32 %v163, %v161
    %v165 = vmul.f32 %v163, %v162
    %v166 = vadd.f32 %v152, %v164
    %v167 = vadd.f32 %v153, %v165
    %168 = vrot.lane.b32.xlu0 %v123, 1
    %v169 = vpop.permute.xlu0 %168
    %170 = vrot.lane.b32.xlu0 %v124, 1
    %v171 = vpop.permute.xlu0 %170
    %vm172 = vcmp.lt.s32.totalorder %v81, 1
    %v173 = vsel %vm172, %v169, %v171
    %v174 = vsel %vm172, %v171, %v169
    %v175 = vsel %vm107, %v174, 0.0
    %v176 = vsel %vm108, %v173, 0.0
    %v177 = vstv %s53
    %v178 = vmul.f32 %v177, %v175
    %v179 = vmul.f32 %v177, %v176
    %v180 = vadd.f32 %v166, %v178
    %v181 = vadd.f32 %v167, %v179
    %v182 = vstv %s54
    %v183 = vmul.f32 %v182, %v123
    %v184 = vmul.f32 %v182, %v124
    %v185 = vadd.f32 %v180, %v183
    %v186 = vadd.f32 %v181, %v184
    %187 = vrot.lane.b32.xlu0 %v123, 127
    %v188 = vpop.permute.xlu0 %187
    %189 = vrot.lane.b32.xlu0 %v124, 127
    %v190 = vpop.permute.xlu0 %189
    %vm191 = vcmp.lt.s32.totalorder %v81, 127
    %v192 = vsel %vm191, %v188, %v190
    %v193 = vsel %vm191, %v190, %v188
    %v194 = vsel %vm109, %v192, 0.0
    %v195 = vsel %vm110, %v193, 0.0
    %v196 = vstv %s55
    %v197 = vmul.f32 %v196, %v194
    %v198 = vmul.f32 %v196, %v195
    %v199 = vadd.f32 %v185, %v197
    %v200 = vadd.f32 %v186, %v198
    %201 = vrot.lane.b32.xlu0 %v123, 113
    %v202 = vpop.permute.xlu0 %201
    %203 = vrot.lane.b32.xlu0 %v124, 113
    %v204 = vpop.permute.xlu0 %203
    %vm205 = vcmp.lt.s32.totalorder %v81, 113
    %v206 = vsel %vm205, %v202, %v204
    %v207 = vsel %vm205, %v204, %v202
    %v208 = vsel %vm119, %v206, 0.0
    %v209 = vsel %vm120, %v207, 0.0
    %v210 = vstv %s56
    %v211 = vmul.f32 %v210, %v208
    %v212 = vmul.f32 %v210, %v209
    %v213 = vadd.f32 %v199, %v211
    %v214 = vadd.f32 %v200, %v212
    %215 = vrot.lane.b32.xlu0 %v123, 112
    %v216 = vpop.permute.xlu0 %215
    %217 = vrot.lane.b32.xlu0 %v124, 112
    %v218 = vpop.permute.xlu0 %217
    %vm219 = vcmp.lt.s32.totalorder %v81, 112
    %v220 = vsel %vm219, %v216, %v218
    %v221 = vsel %vm219, %v218, %v216
    %v222 = vsel %vm113, %v220, 0.0
    %v223 = vsel %vm114, %v221, 0.0
    %v224 = vstv %s57
    %v225 = vmul.f32 %v224, %v222
    %v226 = vmul.f32 %v224, %v223
    %v227 = vadd.f32 %v213, %v225
    %v228 = vadd.f32 %v214, %v226
    %229 = vrot.lane.b32.xlu0 %v123, 111
    %v230 = vpop.permute.xlu0 %229
    %231 = vrot.lane.b32.xlu0 %v124, 111
    %v232 = vpop.permute.xlu0 %231
    %vm233 = vcmp.lt.s32.totalorder %v81, 111
    %v234 = vsel %vm233, %v230, %v232
    %v235 = vsel %vm233, %v232, %v230
    %v236 = vsel %vm121, %v234, 0.0
    %v237 = vsel %vm122, %v235, 0.0
    %v238 = vstv %s58
    %v239 = vmul.f32 %v238, %v236
    %v240 = vmul.f32 %v238, %v237
    %v241 = vadd.f32 %v227, %v239
    %v242 = vadd.f32 %v228, %v240
    %v243 = vstv %s78
    %244 = vrot.lane.b32.xlu0 %v241, 17
    %v245 = vpop.permute.xlu0 %244
    %246 = vrot.lane.b32.xlu0 %v242, 17
    %v247 = vpop.permute.xlu0 %246
    %v248 = vsel %vm130, %v245, %v247
    %v249 = vsel %vm130, %v247, %v245
    %v250 = vsel %vm115, %v249, 0.0
    %v251 = vsel %vm116, %v248, 0.0
    %v252 = vstv %s59
    %v253 = vmul.f32 %v252, %v250
    %v254 = vmul.f32 %v252, %v251
    %v255 = vadd.f32 %v243, %v253
    %v256 = vadd.f32 %v243, %v254
    %257 = vrot.lane.b32.xlu0 %v241, 16
    %v258 = vpop.permute.xlu0 %257
    %259 = vrot.lane.b32.xlu0 %v242, 16
    %v260 = vpop.permute.xlu0 %259
    %v261 = vsel %vm144, %v258, %v260
    %v262 = vsel %vm144, %v260, %v258
    %v263 = vsel %vm111, %v262, 0.0
    %v264 = vsel %vm112, %v261, 0.0
    %v265 = vstv %s60
    %v266 = vmul.f32 %v265, %v263
    %v267 = vmul.f32 %v265, %v264
    %v268 = vadd.f32 %v255, %v266
    %v269 = vadd.f32 %v256, %v267
    %270 = vrot.lane.b32.xlu0 %v241, 15
    %v271 = vpop.permute.xlu0 %270
    %272 = vrot.lane.b32.xlu0 %v242, 15
    %v273 = vpop.permute.xlu0 %272
    %v274 = vsel %vm158, %v271, %v273
    %v275 = vsel %vm158, %v273, %v271
    %v276 = vsel %vm117, %v275, 0.0
    %v277 = vsel %vm118, %v274, 0.0
    %v278 = vstv %s61
    %v279 = vmul.f32 %v278, %v276
    %v280 = vmul.f32 %v278, %v277
    %v281 = vadd.f32 %v268, %v279
    %v282 = vadd.f32 %v269, %v280
    %283 = vrot.lane.b32.xlu0 %v241, 1
    %v284 = vpop.permute.xlu0 %283
    %285 = vrot.lane.b32.xlu0 %v242, 1
    %v286 = vpop.permute.xlu0 %285
    %v287 = vsel %vm172, %v284, %v286
    %v288 = vsel %vm172, %v286, %v284
    %v289 = vsel %vm107, %v288, 0.0
    %v290 = vsel %vm108, %v287, 0.0
    %v291 = vstv %s62
    %v292 = vmul.f32 %v291, %v289
    %v293 = vmul.f32 %v291, %v290
    %v294 = vadd.f32 %v281, %v292
    %v295 = vadd.f32 %v282, %v293
    %v296 = vstv %s63
    %v297 = vmul.f32 %v296, %v241
    %v298 = vmul.f32 %v296, %v242
    %v299 = vadd.f32 %v294, %v297
    %v300 = vadd.f32 %v295, %v298
    %301 = vrot.lane.b32.xlu0 %v241, 127
    %v302 = vpop.permute.xlu0 %301
    %303 = vrot.lane.b32.xlu0 %v242, 127
    %v304 = vpop.permute.xlu0 %303
    %v305 = vsel %vm191, %v302, %v304
    %v306 = vsel %vm191, %v304, %v302
    %v307 = vsel %vm109, %v305, 0.0
    %v308 = vsel %vm110, %v306, 0.0
    %v309 = vstv %s64
    %v310 = vmul.f32 %v309, %v307
    %v311 = vmul.f32 %v309, %v308
    %v312 = vadd.f32 %v299, %v310
    %v313 = vadd.f32 %v300, %v311
    %314 = vrot.lane.b32.xlu0 %v241, 113
    %v315 = vpop.permute.xlu0 %314
    %316 = vrot.lane.b32.xlu0 %v242, 113
    %v317 = vpop.permute.xlu0 %316
    %v318 = vsel %vm205, %v315, %v317
    %v319 = vsel %vm205, %v317, %v315
    %v320 = vsel %vm119, %v318, 0.0
    %v321 = vsel %vm120, %v319, 0.0
    %v322 = vstv %s65
    %v323 = vmul.f32 %v322, %v320
    %v324 = vmul.f32 %v322, %v321
    %v325 = vadd.f32 %v312, %v323
    %v326 = vadd.f32 %v313, %v324
    %327 = vrot.lane.b32.xlu0 %v241, 112
    %v328 = vpop.permute.xlu0 %327
    %329 = vrot.lane.b32.xlu0 %v242, 112
    %v330 = vpop.permute.xlu0 %329
    %v331 = vsel %vm219, %v328, %v330
    %v332 = vsel %vm219, %v330, %v328
    %v333 = vsel %vm113, %v331, 0.0
    %v334 = vsel %vm114, %v332, 0.0
    %v335 = vstv %s66
    %v336 = vmul.f32 %v335, %v333
    %v337 = vmul.f32 %v335, %v334
    %v338 = vadd.f32 %v325, %v336
    %v339 = vadd.f32 %v326, %v337
    %340 = vrot.lane.b32.xlu0 %v241, 111
    %v341 = vpop.permute.xlu0 %340
    %342 = vrot.lane.b32.xlu0 %v242, 111
    %v343 = vpop.permute.xlu0 %342
    %v344 = vsel %vm233, %v341, %v343
    %v345 = vsel %vm233, %v343, %v341
    %v346 = vsel %vm121, %v344, 0.0
    %v347 = vsel %vm122, %v345, 0.0
    %v348 = vstv %s67
    %v349 = vmul.f32 %v348, %v346
    %v350 = vmul.f32 %v348, %v347
    %v351 = vadd.f32 %v338, %v349
    %v352 = vadd.f32 %v339, %v350
    %v353 = vstv %s79
    %354 = vrot.lane.b32.xlu0 %v351, 17
    %v355 = vpop.permute.xlu0 %354
    %356 = vrot.lane.b32.xlu0 %v352, 17
    %v357 = vpop.permute.xlu0 %356
    %v358 = vsel %vm130, %v355, %v357
    %v359 = vsel %vm130, %v357, %v355
    %v360 = vsel %vm115, %v359, 0.0
    %v361 = vsel %vm116, %v358, 0.0
    %v362 = vstv %s68
    %v363 = vmul.f32 %v362, %v360
    %v364 = vmul.f32 %v362, %v361
    %v365 = vadd.f32 %v353, %v363
    %v366 = vadd.f32 %v353, %v364
    %367 = vrot.lane.b32.xlu0 %v351, 16
    %v368 = vpop.permute.xlu0 %367
    %369 = vrot.lane.b32.xlu0 %v352, 16
    %v370 = vpop.permute.xlu0 %369
    %v371 = vsel %vm144, %v368, %v370
    %v372 = vsel %vm144, %v370, %v368
    %v373 = vsel %vm111, %v372, 0.0
    %v374 = vsel %vm112, %v371, 0.0
    %v375 = vstv %s69
    %v376 = vmul.f32 %v375, %v373
    %v377 = vmul.f32 %v375, %v374
    %v378 = vadd.f32 %v365, %v376
    %v379 = vadd.f32 %v366, %v377
    %380 = vrot.lane.b32.xlu0 %v351, 15
    %v381 = vpop.permute.xlu0 %380
    %382 = vrot.lane.b32.xlu0 %v352, 15
    %v383 = vpop.permute.xlu0 %382
    %v384 = vsel %vm158, %v381, %v383
    %v385 = vsel %vm158, %v383, %v381
    %v386 = vsel %vm117, %v385, 0.0
    %v387 = vsel %vm118, %v384, 0.0
    %v388 = vstv %s70
    %v389 = vmul.f32 %v388, %v386
    %v390 = vmul.f32 %v388, %v387
    %v391 = vadd.f32 %v378, %v389
    %v392 = vadd.f32 %v379, %v390
    %393 = vrot.lane.b32.xlu0 %v351, 1
    %v394 = vpop.permute.xlu0 %393
    %395 = vrot.lane.b32.xlu0 %v352, 1
    %v396 = vpop.permute.xlu0 %395
    %v397 = vsel %vm172, %v394, %v396
    %v398 = vsel %vm172, %v396, %v394
    %v399 = vsel %vm107, %v398, 0.0
    %v400 = vsel %vm108, %v397, 0.0
    %v401 = vstv %s71
    %v402 = vmul.f32 %v401, %v399
    %v403 = vmul.f32 %v401, %v400
    %v404 = vadd.f32 %v391, %v402
    %v405 = vadd.f32 %v392, %v403
    %v406 = vstv %s72
    %v407 = vmul.f32 %v406, %v351
    %v408 = vmul.f32 %v406, %v352
    %v409 = vadd.f32 %v404, %v407
    %v410 = vadd.f32 %v405, %v408
    %411 = vrot.lane.b32.xlu0 %v351, 127
    %v412 = vpop.permute.xlu0 %411
    %413 = vrot.lane.b32.xlu0 %v352, 127
    %v414 = vpop.permute.xlu0 %413
    %v415 = vsel %vm191, %v412, %v414
    %v416 = vsel %vm191, %v414, %v412
    %v417 = vsel %vm109, %v415, 0.0
    %v418 = vsel %vm110, %v416, 0.0
    %v419 = vstv %s73
    %v420 = vmul.f32 %v419, %v417
    %v421 = vmul.f32 %v419, %v418
    %v422 = vadd.f32 %v409, %v420
    %v423 = vadd.f32 %v410, %v421
    %424 = vrot.lane.b32.xlu0 %v351, 113
    %v425 = vpop.permute.xlu0 %424
    %426 = vrot.lane.b32.xlu0 %v352, 113
    %v427 = vpop.permute.xlu0 %426
    %v428 = vsel %vm205, %v425, %v427
    %v429 = vsel %vm205, %v427, %v425
    %v430 = vsel %vm119, %v428, 0.0
    %v431 = vsel %vm120, %v429, 0.0
    %v432 = vstv %s74
    %v433 = vmul.f32 %v432, %v430
    %v434 = vmul.f32 %v432, %v431
    %v435 = vadd.f32 %v422, %v433
    %v436 = vadd.f32 %v423, %v434
    %437 = vrot.lane.b32.xlu0 %v351, 112
    %v438 = vpop.permute.xlu0 %437
    %439 = vrot.lane.b32.xlu0 %v352, 112
    %v440 = vpop.permute.xlu0 %439
    %v441 = vsel %vm219, %v438, %v440
    %v442 = vsel %vm219, %v440, %v438
    %v443 = vsel %vm113, %v441, 0.0
    %v444 = vsel %vm114, %v442, 0.0
    %v445 = vstv %s75
    %v446 = vmul.f32 %v445, %v443
    %v447 = vmul.f32 %v445, %v444
    %v448 = vadd.f32 %v435, %v446
    %v449 = vadd.f32 %v436, %v447
    %450 = vrot.lane.b32.xlu0 %v351, 111
    %v451 = vpop.permute.xlu0 %450
    %452 = vrot.lane.b32.xlu0 %v352, 111
    %v453 = vpop.permute.xlu0 %452
    %v454 = vsel %vm233, %v451, %v453
    %v455 = vsel %vm233, %v453, %v451
    %v456 = vsel %vm121, %v454, 0.0
    %v457 = vsel %vm122, %v455, 0.0
    %v458 = vstv %s76
    %v459 = vmul.f32 %v458, %v456
    %v460 = vmul.f32 %v458, %v457
    %v461 = vadd.f32 %v448, %v459
    %v462 = vadd.f32 %v449, %v460
    %463 = vst [vmem:[#allocation9] sm:$0xff] %v461
    %464 = vst [vmem:[#allocation9 + $0x8] sm:$0xff] %v462
    // Predicated region
    $region26: #{tpu_custom_call.1} parent=1 // pred_check
      _
    $region27: #{tpu_custom_call.1} parent=1 // pred_check_branch
      %466 = sbr.rel (0) target = $region29
    $region28: #{tpu_custom_call.1} parent=1 // pred_region
      %s468 = ssub.s32 256, 256
      %469 = vsyncadd [#allocation4], %s468
      %s471 = sshll.u32 [#allocation9], 4
      %s472 = int_to_ptr.vmem [resolvable:$true] %s471
      %474 = dma.vmem_to_hbm [thread:$0]  %s472, 256, %s3, [#allocation4]
    $region29: #{tpu_custom_call.1} parent=1 // pred_fallthru
      _
    // Predicated region
    $region30: #{tpu_custom_call.1} parent=1 // pred_check
      _
    $region31: #{tpu_custom_call.1} parent=1 // pred_check_branch
      %476 = sbr.rel (0) target = $region33
    $region32: #{tpu_custom_call.1} parent=1 // pred_region
      %477 = dma.done [#allocation4], 256
    $region33: #{tpu_custom_call.1} parent=1 // pred_fallthru
      _
    %478 = vsyncpa [#allocation3], 1
    %479 = vsyncpa [#allocation4], 1
    %480 = vsyncpa [#allocation5], 1
    %481 = vsyncpa [#allocation6], 1

</llo_original>
